<compile_context>
chip_gen: v7x
topology: tpu7x:2x2x1
jax: 0.10.0
libtpu: 0.0.40
codegen_flags: <defaults>
</compile_context>

<pallas_src>
import functools

import jax
import jax.numpy as jnp
from jax import lax
from jax.experimental import pallas as pl
from jax.experimental.pallas import tpu as pltpu

EPS = 1e-5                                # PyTorch BatchNorm1d default eps
_VMEM_LIMIT_BYTES = 32 * 1024 * 1024      # safe scoped limit on v5e/v6e/v7x
_BLOCK_BUDGET_BYTES = 8 * 1024 * 1024     # per-grid-step working-set target
_MAX_BATCH_TILE = 32                      # bounds in-kernel unroll / compile time
_SMALL_C_MXU_CUTOFF = 16                  # below this the 1x1 conv stays on the VPU


# ---------------------------------------------------------------------------
# In-kernel building blocks (operate on one (NB, C, L) batch tile).
# ---------------------------------------------------------------------------
def _depthwise_into(acc_ref, x_ref, w, *, stride, padding, l_out):
    """3-tap depthwise conv: acc[n,c,j] = sum_k w[c,k] * x~[n,c,stride*j - padding + k].

    x~ is the zero-padded input.  Each tap is a static-offset lane slice
    accumulated into the matching output columns, so padding needs neither a
    host-side jnp.pad nor any relayout op.
    """
    nb, c, l = x_ref.shape
    acc_ref[...] = jnp.zeros_like(acc_ref)
    x = x_ref[...].astype(jnp.float32) if stride == 1 else None
    for k in range(3):
        # Output columns j whose input index stride*j + k - padding lies in
        # [0, L); everything outside is the implicit zero padding.
        j_lo = max(-((k - padding) // stride), 0)
        j_hi = min((l - 1 - k + padding) // stride, l_out - 1)
        if j_lo > j_hi:
            continue
        start = stride * j_lo + k - padding
        count = j_hi - j_lo + 1
        if stride == 1:
            xs = x[:, :, start:start + count]
        else:
            # TODO(synk): strided lane loads relayout through the XLU; use a
            # stride-specialised layout if stride>1 layers dominate profiles.
            xs = x_ref[:, :, pl.ds(start, count, stride=stride)].astype(jnp.float32)
        acc_ref[:, :, j_lo:j_lo + count] = (
            acc_ref[:, :, j_lo:j_lo + count] + w[None, :, k:k + 1] * xs)


def _pconv_apply(h, pw, *, emit_block, emit_row):
    """1x1 conv of a (NB, C, L_out) tile, handed straight to a consumer.

    Small C: C VPU broadcast-MACs over the whole tile (emit_block gets the
    (NB, C_out, L_out) result).  Large C: one MXU contraction per batch row
    (emit_row gets (row, (C_out, L_out))), avoiding any cross-sublane stack.
    """
    nb, c_in, _ = h.shape
    if c_in < _SMALL_C_MXU_CUTOFF:
        y = pw[None, :, 0:1] * h[:, 0:1, :]
        for ci in range(1, c_in):
            y = y + pw[None, :, ci:ci + 1] * h[:, ci:ci + 1, :]
        emit_block(y)
    else:
        # f32 MXU accumulate.  (On v6e/v7x, casting pw/h to bf16 here roughly
        # doubles MXU throughput; kept f32 for numerical parity.)
        for nbi in range(nb):
            emit_row(nbi, jnp.dot(pw, h[nbi], preferred_element_type=jnp.float32))


def _store_moments_block(s_ref, y):
    """Per-channel [sum, sumsq] over the length axis into a (NB, C, 2) block."""
    s_ref[:, :, 0:1] = jnp.sum(y, axis=-1, keepdims=True)
    s_ref[:, :, 1:2] = jnp.sum(y * y, axis=-1, keepdims=True)


def _store_moments_row(s_ref, nbi, y):
    s_ref[nbi, :, 0:1] = jnp.sum(y, axis=-1, keepdims=True)
    s_ref[nbi, :, 1:2] = jnp.sum(y * y, axis=-1, keepdims=True)


def _front(x_ref, dw_ref, a1_ref, acc_ref, *, stride, padding, l_out):
    """Shared front of passes 2/3: depthwise conv -> bn1 affine -> ReLU."""
    _depthwise_into(acc_ref, x_ref, dw_ref[...].astype(jnp.float32),
                    stride=stride, padding=padding, l_out=l_out)
    a1 = a1_ref[...]
    return jnp.maximum(acc_ref[...] * a1[None, :, 0:1] + a1[None, :, 1:2], 0.0)


# ---------------------------------------------------------------------------
# Kernels (one batch tile of NB rows per grid step).
# ---------------------------------------------------------------------------
def _stats1_kernel(x_ref, dw_ref, s_ref, acc_ref, *, stride, padding, l_out):
    _depthwise_into(acc_ref, x_ref, dw_ref[...].astype(jnp.float32),
                    stride=stride, padding=padding, l_out=l_out)
    _store_moments_block(s_ref, acc_ref[...])


def _stats2_kernel(x_ref, dw_ref, a1_ref, pw_ref, s_ref, acc_ref, *,
                   stride, padding, l_out):
    h = _front(x_ref, dw_ref, a1_ref, acc_ref,
               stride=stride, padding=padding, l_out=l_out)
    _pconv_apply(
        h, pw_ref[...].astype(jnp.float32),
        emit_block=lambda y: _store_moments_block(s_ref, y),
        emit_row=lambda nbi, y: _store_moments_row(s_ref, nbi, y))


def _output_kernel(x_ref, dw_ref, a1_ref, pw_ref, a2_ref, o_ref, acc_ref, *,
                   stride, padding, l_out):
    h = _front(x_ref, dw_ref, a1_ref, acc_ref,
               stride=stride, padding=padding, l_out=l_out)
    a2 = a2_ref[...]

    def emit_block(y):
        o_ref[...] = jnp.maximum(
            y * a2[None, :, 0:1] + a2[None, :, 1:2], 0.0).astype(o_ref.dtype)

    def emit_row(nbi, y):
        o_ref[nbi] = jnp.maximum(
            y * a2[:, 0:1] + a2[:, 1:2], 0.0).astype(o_ref.dtype)

    _pconv_apply(h, pw_ref[...].astype(jnp.float32),
                 emit_block=emit_block, emit_row=emit_row)


# ---------------------------------------------------------------------------
# Host-side glue.
# ---------------------------------------------------------------------------
def _bn_affine(partials, gamma, beta, count):
    """Fold [sum, sumsq] partials (N, C, 2) + BN weights into per-channel
    (scale, shift); PyTorch training-mode semantics (biased var, eps=1e-5)."""
    tot = jnp.sum(partials.astype(jnp.float32), axis=0)        # (C, 2)
    mean = tot[:, 0] / count
    var = jnp.maximum(tot[:, 1] / count - mean * mean, 0.0)
    scale = gamma.astype(jnp.float32) * lax.rsqrt(var + EPS)
    shift = beta.astype(jnp.float32) - mean * scale
    return jnp.stack([scale, shift], axis=-1)                  # (C, 2)


def _pick_batch_tile(n_batch, bytes_per_row):
    """Largest divisor of N whose per-step working set fits the VMEM budget."""
    nb_max = max(1, min(_MAX_BATCH_TILE,
                        _BLOCK_BUDGET_BYTES // max(bytes_per_row, 1)))
    nb = 1
    for d in range(1, n_batch + 1):
        if d <= nb_max and n_batch % d == 0:
            nb = d
    return nb


@functools.partial(jax.jit, static_argnames=("stride", "padding"))
def dsconv(x, dw, gamma1, beta1, pw, gamma2, beta2, *, stride=1, padding=0):
    """DSConv forward (training-mode BatchNorm statistics).

    x: (N, C, L);  dw: (C, 3) depthwise taps;  pw: (C_out, C);
    gamma1/beta1: (C,);  gamma2/beta2: (C_out,).
    """
    n_batch, n_ch, length = x.shape
    c_out = pw.shape[0]
    l_out = (length + 2 * padding - 3) // stride + 1
    assert l_out >= 1, "sequence too short for kernel_size=3"

    dw = dw.astype(jnp.float32)
    pw = pw.astype(jnp.float32)
    count = float(n_batch * l_out)

    # Per-row working set: x block (double-buffered) + acc scratch + output
    # block (double-buffered) + tiny stats.  Sized to pick the batch tile.
    bytes_per_row = 4 * (2 * n_ch * length + n_ch * l_out
                         + 2 * c_out * l_out + 2 * n_ch + 2 * c_out)
    nb = _pick_batch_tile(n_batch, bytes_per_row)
    grid = (n_batch // nb,)

    # One grid step per NB-row batch tile; the whole sequence stays on lanes.
    x_spec = pl.BlockSpec((nb, n_ch, length), lambda t: (t, 0, 0))
    dw_spec = pl.BlockSpec((n_ch, 3), lambda t: (0, 0))
    pw_spec = pl.BlockSpec((c_out, n_ch), lambda t: (0, 0))
    a1_spec = pl.BlockSpec((n_ch, 2), lambda t: (0, 0))
    a2_spec = pl.BlockSpec((c_out, 2), lambda t: (0, 0))
    stats1_spec = pl.BlockSpec((nb, n_ch, 2), lambda t: (t, 0, 0))
    stats2_spec = pl.BlockSpec((nb, c_out, 2), lambda t: (t, 0, 0))
    out_spec = pl.BlockSpec((nb, c_out, l_out), lambda t: (t, 0, 0))

    params = pltpu.CompilerParams(
        dimension_semantics=("parallel",),      # v7x: shard tiles across both TCs
        vmem_limit_bytes=_VMEM_LIMIT_BYTES,
    )
    static = dict(stride=stride, padding=padding, l_out=l_out)
    acc_scratch = pltpu.VMEM((nb, n_ch, l_out), jnp.float32)

    # Pass 1: depthwise conv -> per-tile sum/sumsq partials for bn1.
    stats1 = pl.pallas_call(
        functools.partial(_stats1_kernel, **static),
        grid=grid,
        in_specs=[x_spec, dw_spec],
        out_specs=stats1_spec,
        out_shape=jax.ShapeDtypeStruct((n_batch, n_ch, 2), jnp.float32),
        scratch_shapes=[acc_scratch],
        compiler_params=params,
    )(x, dw)
    a1 = _bn_affine(stats1, gamma1, beta1, count)

    # Pass 2: dconv + bn1 + relu + pconv -> per-tile partials for bn2.
    stats2 = pl.pallas_call(
        functools.partial(_stats2_kernel, **static),
        grid=grid,
        in_specs=[x_spec, dw_spec, a1_spec, pw_spec],
        out_specs=stats2_spec,
        out_shape=jax.ShapeDtypeStruct((n_batch, c_out, 2), jnp.float32),
        scratch_shapes=[acc_scratch],
        compiler_params=params,
    )(x, dw, a1, pw)
    a2 = _bn_affine(stats2, gamma2, beta2, count)

    # Pass 3: full chain + bn2 + relu -> (N, C_out, L_out) output tiles.
    out = pl.pallas_call(
        functools.partial(_output_kernel, **static),
        grid=grid,
        in_specs=[x_spec, dw_spec, a1_spec, pw_spec, a2_spec],
        out_specs=out_spec,
        out_shape=jax.ShapeDtypeStruct((n_batch, c_out, l_out), x.dtype),
        scratch_shapes=[acc_scratch],
        compiler_params=params,
    )(x, dw, a1, pw, a2)
    return out


# ---------------------------------------------------------------------------
# Self-test.
# ---------------------------------------------------------------------------
def _reference(x, dw, gamma1, beta1, pw, gamma2, beta2, *, stride, padding):
    """Pure-JAX reference of the same forward pass (training-mode BN)."""
    l_out = (x.shape[-1] + 2 * padding - 3) // stride + 1
    xp = jnp.pad(x, ((0, 0), (0, 0), (padding, padding)))
    y1 = sum(dw[None, :, k:k + 1]
             * xp[:, :, k:k + stride * (l_out - 1) + 1:stride]
             for k in range(3))

    def bn_relu(v, g, b):
        m = v.mean(axis=(0, 2), keepdims=True)
        var = ((v - m) ** 2).mean(axis=(0, 2), keepdims=True)
        return jnp.maximum((v - m) * lax.rsqrt(var + EPS)
                           * g[None, :, None] + b[None, :, None], 0.0)

    h = bn_relu(y1, gamma1, beta1)
    y2 = jnp.einsum("oc,ncl->nol", pw, h, precision=lax.Precision.HIGHEST)
    return bn_relu(y2, gamma2, beta2)


def _run_case(key, *, n, c_in, c_out, length, stride, padding):
    k_x, k_dw, k_pw, k_g1, k_b1, k_g2, k_b2 = jax.random.split(key, 7)
    x = jax.random.normal(k_x, (n, c_in, length), dtype=jnp.float32)
    # Conv1d(C, C, 3, groups=C).weight: (C, 1, 3) -> (C, 3)
    dw = jax.random.normal(k_dw, (c_in, 1, 3), dtype=jnp.float32)[:, 0, :]
    # Conv1d(C, C_out, 1).weight: (C_out, C, 1) -> (C_out, C)
    pw = (jax.random.normal(k_pw, (c_out, c_in, 1), dtype=jnp.float32)[:, :, 0]
          / (c_in ** 0.5))
    gamma1 = 1.0 + 0.1 * jax.random.normal(k_g1, (c_in,), dtype=jnp.float32)
    beta1 = 0.1 * jax.random.normal(k_b1, (c_in,), dtype=jnp.float32)
    gamma2 = 1.0 + 0.1 * jax.random.normal(k_g2, (c_out,), dtype=jnp.float32)
    beta2 = 0.1 * jax.random.normal(k_b2, (c_out,), dtype=jnp.float32)

    out = dsconv(x, dw, gamma1, beta1, pw, gamma2, beta2,
                 stride=stride, padding=padding)
    out = jax.block_until_ready(out)

    l_out = (length + 2 * padding - 3) // stride + 1
    assert out.shape == (n, c_out, l_out), out.shape
    assert bool(jnp.all(jnp.isfinite(out)))

    ref_out = _reference(x, dw, gamma1, beta1, pw, gamma2, beta2,
                         stride=stride, padding=padding)
    max_err = float(jnp.max(jnp.abs(out - ref_out)))
    assert bool(jnp.allclose(out, ref_out, atol=5e-4, rtol=5e-4)), max_err


if __name__ == "__main__":
    key = jax.random.PRNGKey(0)
    k1, k2 = jax.random.split(key)
    # Small-C config (VPU pointwise path): DSConv(f_3x3=4, f_1x1=8, stride=1, padding=1).
    _run_case(k1, n=2, c_in=4, c_out=8, length=16, stride=1, padding=1)
    # Larger-C, lane-dense config (MXU pointwise path): DSConv(32, 32, stride=1, padding=1).
    _run_case(k2, n=2, c_in=32, c_out=32, length=128, stride=1, padding=1)
    print("KERNEL_OK")
</pallas_src>

<mosaic_0001>
module attributes {stable_mosaic.version = 11 : i64} {
  func.func @_stats1_kernel(%arg0: i32, %arg1: memref<2x4x16xf32, #tpu.memory_space<vmem>>, %arg2: memref<4x3xf32, #tpu.memory_space<vmem>>, %arg3: memref<2x4x2xf32, #tpu.memory_space<vmem>>, %arg4: memref<2x4x16xf32, #tpu.memory_space<vmem>>) attributes {dimension_semantics = [#tpu.dimension_semantics<parallel>], iteration_bounds = array<i64: 1>, scalar_prefetch = 0 : i64, scratch_operands = 1 : i64, tpu.core_type = #tpu.core_type<tc>, window_params = [{transform_indices = @transform_0, window_bounds = array<i64: 2, 4, 16>}, {pipeline_mode = #tpu.pipeline_mode<synchronous>, transform_indices = @transform_1, window_bounds = array<i64: 4, 3>}, {transform_indices = @transform_2, window_bounds = array<i64: 2, 4, 2>}]} {
    %c0 = arith.constant 0 : index
    %c0_0 = arith.constant 0 : index
    %0 = vector.load %arg2[%c0, %c0_0] : memref<4x3xf32, #tpu.memory_space<vmem>>, vector<4x3xf32>
    %cst = arith.constant 0.000000e+00 : f32
    %1 = vector.broadcast %cst : f32 to vector<2x4x16xf32>
    %c0_1 = arith.constant 0 : index
    %c0_2 = arith.constant 0 : index
    %c0_3 = arith.constant 0 : index
    %2 = vector.load %arg4[%c0_1, %c0_2, %c0_3] : memref<2x4x16xf32, #tpu.memory_space<vmem>>, vector<2x4x16xf32>
    tpu.vector_store %arg4[%c0_1, %c0_2, %c0_3], %1 {strides = array<i32>} : memref<2x4x16xf32, #tpu.memory_space<vmem>>, vector<2x4x16xf32>,
    %c0_4 = arith.constant 0 : index
    %c0_5 = arith.constant 0 : index
    %c0_6 = arith.constant 0 : index
    %3 = vector.load %arg1[%c0_4, %c0_5, %c0_6] : memref<2x4x16xf32, #tpu.memory_space<vmem>>, vector<2x4x16xf32>
    %4 = vector.extract_strided_slice %3 {offsets = [0, 0, 0], sizes = [2, 4, 15], strides = [1, 1, 1]} : vector<2x4x16xf32> to vector<2x4x15xf32>
    %c0_7 = arith.constant 0 : index
    %c0_8 = arith.constant 0 : index
    %c1 = arith.constant 1 : index
    %5 = vector.load %arg4[%c0_7, %c0_8, %c1] : memref<2x4x16xf32, #tpu.memory_space<vmem>>, vector<2x4x15xf32>
    %6 = vector.extract_strided_slice %0 {offsets = [0, 0], sizes = [4, 1], strides = [1, 1]} : vector<4x3xf32> to vector<4x1xf32>
    %7 = vector.shape_cast %6 : vector<4x1xf32> to vector<1x4x1xf32>
    %8 = vector.broadcast %7 : vector<1x4x1xf32> to vector<2x4x15xf32>
    %9 = arith.mulf %8, %4 : vector<2x4x15xf32>
    %10 = arith.addf %5, %9 : vector<2x4x15xf32>
    %c0_9 = arith.constant 0 : index
    %c0_10 = arith.constant 0 : index
    %c1_11 = arith.constant 1 : index
    %11 = vector.load %arg4[%c0_9, %c0_10, %c1_11] : memref<2x4x16xf32, #tpu.memory_space<vmem>>, vector<2x4x15xf32>
    tpu.vector_store %arg4[%c0_9, %c0_10, %c1_11], %10 {strides = array<i32>} : memref<2x4x16xf32, #tpu.memory_space<vmem>>, vector<2x4x15xf32>,
    %c0_12 = arith.constant 0 : index
    %c0_13 = arith.constant 0 : index
    %c0_14 = arith.constant 0 : index
    %12 = vector.load %arg4[%c0_12, %c0_13, %c0_14] : memref<2x4x16xf32, #tpu.memory_space<vmem>>, vector<2x4x16xf32>
    %13 = vector.extract_strided_slice %0 {offsets = [0, 1], sizes = [4, 1], strides = [1, 1]} : vector<4x3xf32> to vector<4x1xf32>
    %14 = vector.shape_cast %13 : vector<4x1xf32> to vector<1x4x1xf32>
    %15 = vector.broadcast %14 : vector<1x4x1xf32> to vector<2x4x16xf32>
    %16 = arith.mulf %15, %3 : vector<2x4x16xf32>
    %17 = arith.addf %12, %16 : vector<2x4x16xf32>
    %c0_15 = arith.constant 0 : index
    %c0_16 = arith.constant 0 : index
    %c0_17 = arith.constant 0 : index
    %18 = vector.load %arg4[%c0_15, %c0_16, %c0_17] : memref<2x4x16xf32, #tpu.memory_space<vmem>>, vector<2x4x16xf32>
    tpu.vector_store %arg4[%c0_15, %c0_16, %c0_17], %17 {strides = array<i32>} : memref<2x4x16xf32, #tpu.memory_space<vmem>>, vector<2x4x16xf32>,
    %19 = vector.extract_strided_slice %3 {offsets = [0, 0, 1], sizes = [2, 4, 15], strides = [1, 1, 1]} : vector<2x4x16xf32> to vector<2x4x15xf32>
    %c0_18 = arith.constant 0 : index
    %c0_19 = arith.constant 0 : index
    %c0_20 = arith.constant 0 : index
    %20 = vector.load %arg4[%c0_18, %c0_19, %c0_20] : memref<2x4x16xf32, #tpu.memory_space<vmem>>, vector<2x4x15xf32>
    %21 = vector.extract_strided_slice %0 {offsets = [0, 2], sizes = [4, 1], strides = [1, 1]} : vector<4x3xf32> to vector<4x1xf32>
    %22 = vector.shape_cast %21 : vector<4x1xf32> to vector<1x4x1xf32>
    %23 = vector.broadcast %22 : vector<1x4x1xf32> to vector<2x4x15xf32>
    %24 = arith.mulf %23, %19 : vector<2x4x15xf32>
    %25 = arith.addf %20, %24 : vector<2x4x15xf32>
    %c0_21 = arith.constant 0 : index
    %c0_22 = arith.constant 0 : index
    %c0_23 = arith.constant 0 : index
    %26 = vector.load %arg4[%c0_21, %c0_22, %c0_23] : memref<2x4x16xf32, #tpu.memory_space<vmem>>, vector<2x4x15xf32>
    tpu.vector_store %arg4[%c0_21, %c0_22, %c0_23], %25 {strides = array<i32>} : memref<2x4x16xf32, #tpu.memory_space<vmem>>, vector<2x4x15xf32>,
    %c0_24 = arith.constant 0 : index
    %c0_25 = arith.constant 0 : index
    %c0_26 = arith.constant 0 : index
    %27 = vector.load %arg4[%c0_24, %c0_25, %c0_26] : memref<2x4x16xf32, #tpu.memory_space<vmem>>, vector<2x4x16xf32>
    %cst_27 = arith.constant dense<0.000000e+00> : vector<2x4xf32>
    %28 = vector.multi_reduction <add>, %27, %cst_27 [2] : vector<2x4x16xf32> to vector<2x4xf32>
    %29 = vector.shape_cast %28 : vector<2x4xf32> to vector<2x4x1xf32>
    %c0_28 = arith.constant 0 : index
    %c0_29 = arith.constant 0 : index
    %c0_30 = arith.constant 0 : index
    %30 = vector.load %arg3[%c0_28, %c0_29, %c0_30] : memref<2x4x2xf32, #tpu.memory_space<vmem>>, vector<2x4x1xf32>
    tpu.vector_store %arg3[%c0_28, %c0_29, %c0_30], %29 {strides = array<i32>} : memref<2x4x2xf32, #tpu.memory_space<vmem>>, vector<2x4x1xf32>,
    %31 = arith.mulf %27, %27 : vector<2x4x16xf32>
    %cst_31 = arith.constant dense<0.000000e+00> : vector<2x4xf32>
    %32 = vector.multi_reduction <add>, %31, %cst_31 [2] : vector<2x4x16xf32> to vector<2x4xf32>
    %33 = vector.shape_cast %32 : vector<2x4xf32> to vector<2x4x1xf32>
    %c0_32 = arith.constant 0 : index
    %c0_33 = arith.constant 0 : index
    %c1_34 = arith.constant 1 : index
    %34 = vector.load %arg3[%c0_32, %c0_33, %c1_34] : memref<2x4x2xf32, #tpu.memory_space<vmem>>, vector<2x4x1xf32>
    tpu.vector_store %arg3[%c0_32, %c0_33, %c1_34], %33 {strides = array<i32>} : memref<2x4x2xf32, #tpu.memory_space<vmem>>, vector<2x4x1xf32>,
    return
  }
  func.func @transform_0(%arg0: i32) -> (i32, i32, i32) {
    %c0_i32 = arith.constant 0 : i32
    %c0_i32_0 = arith.constant 0 : i32
    %c0_i32_1 = arith.constant 0 : i32
    return %arg0, %c0_i32, %c0_i32_0 : i32, i32, i32
  }
  func.func @transform_1(%arg0: i32) -> (i32, i32) {
    %c0_i32 = arith.constant 0 : i32
    %c0_i32_0 = arith.constant 0 : i32
    %c0_i32_1 = arith.constant 0 : i32
    return %c0_i32, %c0_i32_0 : i32, i32
  }
  func.func @transform_2(%arg0: i32) -> (i32, i32, i32) {
    %c0_i32 = arith.constant 0 : i32
    %c0_i32_0 = arith.constant 0 : i32
    %c0_i32_1 = arith.constant 0 : i32
    return %arg0, %c0_i32, %c0_i32_0 : i32, i32, i32
  }
}

module attributes {stable_mosaic.version = 11 : i64} {
  func.func @_stats2_kernel(%arg0: i32, %arg1: memref<2x4x16xf32, #tpu.memory_space<vmem>>, %arg2: memref<4x3xf32, #tpu.memory_space<vmem>>, %arg3: memref<4x2xf32, #tpu.memory_space<vmem>>, %arg4: memref<8x4xf32, #tpu.memory_space<vmem>>, %arg5: memref<2x8x2xf32, #tpu.memory_space<vmem>>, %arg6: memref<2x4x16xf32, #tpu.memory_space<vmem>>) attributes {dimension_semantics = [#tpu.dimension_semantics<parallel>], iteration_bounds = array<i64: 1>, scalar_prefetch = 0 : i64, scratch_operands = 1 : i64, tpu.core_type = #tpu.core_type<tc>, window_params = [{transform_indices = @transform_0, window_bounds = array<i64: 2, 4, 16>}, {pipeline_mode = #tpu.pipeline_mode<synchronous>, transform_indices = @transform_1, window_bounds = array<i64: 4, 3>}, {pipeline_mode = #tpu.pipeline_mode<synchronous>, transform_indices = @transform_2, window_bounds = array<i64: 4, 2>}, {pipeline_mode = #tpu.pipeline_mode<synchronous>, transform_indices = @transform_3, window_bounds = array<i64: 8, 4>}, {transform_indices = @transform_4, window_bounds = array<i64: 2, 8, 2>}]} {
    %c0 = arith.constant 0 : index
    %c0_0 = arith.constant 0 : index
    %0 = vector.load %arg2[%c0, %c0_0] : memref<4x3xf32, #tpu.memory_space<vmem>>, vector<4x3xf32>
    %cst = arith.constant 0.000000e+00 : f32
    %1 = vector.broadcast %cst : f32 to vector<2x4x16xf32>
    %c0_1 = arith.constant 0 : index
    %c0_2 = arith.constant 0 : index
    %c0_3 = arith.constant 0 : index
    %2 = vector.load %arg6[%c0_1, %c0_2, %c0_3] : memref<2x4x16xf32, #tpu.memory_space<vmem>>, vector<2x4x16xf32>
    tpu.vector_store %arg6[%c0_1, %c0_2, %c0_3], %1 {strides = array<i32>} : memref<2x4x16xf32, #tpu.memory_space<vmem>>, vector<2x4x16xf32>,
    %c0_4 = arith.constant 0 : index
    %c0_5 = arith.constant 0 : index
    %c0_6 = arith.constant 0 : index
    %3 = vector.load %arg1[%c0_4, %c0_5, %c0_6] : memref<2x4x16xf32, #tpu.memory_space<vmem>>, vector<2x4x16xf32>
    %4 = vector.extract_strided_slice %3 {offsets = [0, 0, 0], sizes = [2, 4, 15], strides = [1, 1, 1]} : vector<2x4x16xf32> to vector<2x4x15xf32>
    %c0_7 = arith.constant 0 : index
    %c0_8 = arith.constant 0 : index
    %c1 = arith.constant 1 : index
    %5 = vector.load %arg6[%c0_7, %c0_8, %c1] : memref<2x4x16xf32, #tpu.memory_space<vmem>>, vector<2x4x15xf32>
    %6 = vector.extract_strided_slice %0 {offsets = [0, 0], sizes = [4, 1], strides = [1, 1]} : vector<4x3xf32> to vector<4x1xf32>
    %7 = vector.shape_cast %6 : vector<4x1xf32> to vector<1x4x1xf32>
    %8 = vector.broadcast %7 : vector<1x4x1xf32> to vector<2x4x15xf32>
    %9 = arith.mulf %8, %4 : vector<2x4x15xf32>
    %10 = arith.addf %5, %9 : vector<2x4x15xf32>
    %c0_9 = arith.constant 0 : index
    %c0_10 = arith.constant 0 : index
    %c1_11 = arith.constant 1 : index
    %11 = vector.load %arg6[%c0_9, %c0_10, %c1_11] : memref<2x4x16xf32, #tpu.memory_space<vmem>>, vector<2x4x15xf32>
    tpu.vector_store %arg6[%c0_9, %c0_10, %c1_11], %10 {strides = array<i32>} : memref<2x4x16xf32, #tpu.memory_space<vmem>>, vector<2x4x15xf32>,
    %c0_12 = arith.constant 0 : index
    %c0_13 = arith.constant 0 : index
    %c0_14 = arith.constant 0 : index
    %12 = vector.load %arg6[%c0_12, %c0_13, %c0_14] : memref<2x4x16xf32, #tpu.memory_space<vmem>>, vector<2x4x16xf32>
    %13 = vector.extract_strided_slice %0 {offsets = [0, 1], sizes = [4, 1], strides = [1, 1]} : vector<4x3xf32> to vector<4x1xf32>
    %14 = vector.shape_cast %13 : vector<4x1xf32> to vector<1x4x1xf32>
    %15 = vector.broadcast %14 : vector<1x4x1xf32> to vector<2x4x16xf32>
    %16 = arith.mulf %15, %3 : vector<2x4x16xf32>
    %17 = arith.addf %12, %16 : vector<2x4x16xf32>
    %c0_15 = arith.constant 0 : index
    %c0_16 = arith.constant 0 : index
    %c0_17 = arith.constant 0 : index
    %18 = vector.load %arg6[%c0_15, %c0_16, %c0_17] : memref<2x4x16xf32, #tpu.memory_space<vmem>>, vector<2x4x16xf32>
    tpu.vector_store %arg6[%c0_15, %c0_16, %c0_17], %17 {strides = array<i32>} : memref<2x4x16xf32, #tpu.memory_space<vmem>>, vector<2x4x16xf32>,
    %19 = vector.extract_strided_slice %3 {offsets = [0, 0, 1], sizes = [2, 4, 15], strides = [1, 1, 1]} : vector<2x4x16xf32> to vector<2x4x15xf32>
    %c0_18 = arith.constant 0 : index
    %c0_19 = arith.constant 0 : index
    %c0_20 = arith.constant 0 : index
    %20 = vector.load %arg6[%c0_18, %c0_19, %c0_20] : memref<2x4x16xf32, #tpu.memory_space<vmem>>, vector<2x4x15xf32>
    %21 = vector.extract_strided_slice %0 {offsets = [0, 2], sizes = [4, 1], strides = [1, 1]} : vector<4x3xf32> to vector<4x1xf32>
    %22 = vector.shape_cast %21 : vector<4x1xf32> to vector<1x4x1xf32>
    %23 = vector.broadcast %22 : vector<1x4x1xf32> to vector<2x4x15xf32>
    %24 = arith.mulf %23, %19 : vector<2x4x15xf32>
    %25 = arith.addf %20, %24 : vector<2x4x15xf32>
    %c0_21 = arith.constant 0 : index
    %c0_22 = arith.constant 0 : index
    %c0_23 = arith.constant 0 : index
    %26 = vector.load %arg6[%c0_21, %c0_22, %c0_23] : memref<2x4x16xf32, #tpu.memory_space<vmem>>, vector<2x4x15xf32>
    tpu.vector_store %arg6[%c0_21, %c0_22, %c0_23], %25 {strides = array<i32>} : memref<2x4x16xf32, #tpu.memory_space<vmem>>, vector<2x4x15xf32>,
    %c0_24 = arith.constant 0 : index
    %c0_25 = arith.constant 0 : index
    %27 = vector.load %arg3[%c0_24, %c0_25] : memref<4x2xf32, #tpu.memory_space<vmem>>, vector<4x2xf32>
    %c0_26 = arith.constant 0 : index
    %c0_27 = arith.constant 0 : index
    %c0_28 = arith.constant 0 : index
    %28 = vector.load %arg6[%c0_26, %c0_27, %c0_28] : memref<2x4x16xf32, #tpu.memory_space<vmem>>, vector<2x4x16xf32>
    %29 = vector.extract_strided_slice %27 {offsets = [0, 0], sizes = [4, 1], strides = [1, 1]} : vector<4x2xf32> to vector<4x1xf32>
    %30 = vector.shape_cast %29 : vector<4x1xf32> to vector<1x4x1xf32>
    %31 = vector.broadcast %30 : vector<1x4x1xf32> to vector<2x4x16xf32>
    %32 = arith.mulf %28, %31 : vector<2x4x16xf32>
    %33 = vector.extract_strided_slice %27 {offsets = [0, 1], sizes = [4, 1], strides = [1, 1]} : vector<4x2xf32> to vector<4x1xf32>
    %34 = vector.shape_cast %33 : vector<4x1xf32> to vector<1x4x1xf32>
    %35 = vector.broadcast %34 : vector<1x4x1xf32> to vector<2x4x16xf32>
    %36 = arith.addf %32, %35 : vector<2x4x16xf32>
    %cst_29 = arith.constant 0.000000e+00 : f32
    %37 = vector.broadcast %cst_29 : f32 to vector<2x4x16xf32>
    %38 = arith.maximumf %36, %37 : vector<2x4x16xf32>
    %c0_30 = arith.constant 0 : index
    %c0_31 = arith.constant 0 : index
    %39 = vector.load %arg4[%c0_30, %c0_31] : memref<8x4xf32, #tpu.memory_space<vmem>>, vector<8x4xf32>
    %40 = vector.extract_strided_slice %39 {offsets = [0, 0], sizes = [8, 1], strides = [1, 1]} : vector<8x4xf32> to vector<8x1xf32>
    %41 = vector.shape_cast %40 : vector<8x1xf32> to vector<1x8x1xf32>
    %42 = vector.extract_strided_slice %38 {offsets = [0, 0, 0], sizes = [2, 1, 16], strides = [1, 1, 1]} : vector<2x4x16xf32> to vector<2x1x16xf32>
    %43 = vector.broadcast %41 : vector<1x8x1xf32> to vector<2x8x16xf32>
    %44 = vector.broadcast %42 : vector<2x1x16xf32> to vector<2x8x16xf32>
    %45 = arith.mulf %43, %44 : vector<2x8x16xf32>
    %46 = vector.extract_strided_slice %39 {offsets = [0, 1], sizes = [8, 1], strides = [1, 1]} : vector<8x4xf32> to vector<8x1xf32>
    %47 = vector.shape_cast %46 : vector<8x1xf32> to vector<1x8x1xf32>
    %48 = vector.extract_strided_slice %38 {offsets = [0, 1, 0], sizes = [2, 1, 16], strides = [1, 1, 1]} : vector<2x4x16xf32> to vector<2x1x16xf32>
    %49 = vector.broadcast %47 : vector<1x8x1xf32> to vector<2x8x16xf32>
    %50 = vector.broadcast %48 : vector<2x1x16xf32> to vector<2x8x16xf32>
    %51 = arith.mulf %49, %50 : vector<2x8x16xf32>
    %52 = arith.addf %45, %51 : vector<2x8x16xf32>
    %53 = vector.extract_strided_slice %39 {offsets = [0, 2], sizes = [8, 1], strides = [1, 1]} : vector<8x4xf32> to vector<8x1xf32>
    %54 = vector.shape_cast %53 : vector<8x1xf32> to vector<1x8x1xf32>
    %55 = vector.extract_strided_slice %38 {offsets = [0, 2, 0], sizes = [2, 1, 16], strides = [1, 1, 1]} : vector<2x4x16xf32> to vector<2x1x16xf32>
    %56 = vector.broadcast %54 : vector<1x8x1xf32> to vector<2x8x16xf32>
    %57 = vector.broadcast %55 : vector<2x1x16xf32> to vector<2x8x16xf32>
    %58 = arith.mulf %56, %57 : vector<2x8x16xf32>
    %59 = arith.addf %52, %58 : vector<2x8x16xf32>
    %60 = vector.extract_strided_slice %39 {offsets = [0, 3], sizes = [8, 1], strides = [1, 1]} : vector<8x4xf32> to vector<8x1xf32>
    %61 = vector.shape_cast %60 : vector<8x1xf32> to vector<1x8x1xf32>
    %62 = vector.extract_strided_slice %38 {offsets = [0, 3, 0], sizes = [2, 1, 16], strides = [1, 1, 1]} : vector<2x4x16xf32> to vector<2x1x16xf32>
    %63 = vector.broadcast %61 : vector<1x8x1xf32> to vector<2x8x16xf32>
    %64 = vector.broadcast %62 : vector<2x1x16xf32> to vector<2x8x16xf32>
    %65 = arith.mulf %63, %64 : vector<2x8x16xf32>
    %66 = arith.addf %59, %65 : vector<2x8x16xf32>
    %cst_32 = arith.constant dense<0.000000e+00> : vector<2x8xf32>
    %67 = vector.multi_reduction <add>, %66, %cst_32 [2] : vector<2x8x16xf32> to vector<2x8xf32>
    %68 = vector.shape_cast %67 : vector<2x8xf32> to vector<2x8x1xf32>
    %c0_33 = arith.constant 0 : index
    %c0_34 = arith.constant 0 : index
    %c0_35 = arith.constant 0 : index
    %69 = vector.load %arg5[%c0_33, %c0_34, %c0_35] : memref<2x8x2xf32, #tpu.memory_space<vmem>>, vector<2x8x1xf32>
    tpu.vector_store %arg5[%c0_33, %c0_34, %c0_35], %68 {strides = array<i32>} : memref<2x8x2xf32, #tpu.memory_space<vmem>>, vector<2x8x1xf32>,
    %70 = arith.mulf %66, %66 : vector<2x8x16xf32>
    %cst_36 = arith.constant dense<0.000000e+00> : vector<2x8xf32>
    %71 = vector.multi_reduction <add>, %70, %cst_36 [2] : vector<2x8x16xf32> to vector<2x8xf32>
    %72 = vector.shape_cast %71 : vector<2x8xf32> to vector<2x8x1xf32>
    %c0_37 = arith.constant 0 : index
    %c0_38 = arith.constant 0 : index
    %c1_39 = arith.constant 1 : index
    %73 = vector.load %arg5[%c0_37, %c0_38, %c1_39] : memref<2x8x2xf32, #tpu.memory_space<vmem>>, vector<2x8x1xf32>
    tpu.vector_store %arg5[%c0_37, %c0_38, %c1_39], %72 {strides = array<i32>} : memref<2x8x2xf32, #tpu.memory_space<vmem>>, vector<2x8x1xf32>,
    return
  }
  func.func @transform_0(%arg0: i32) -> (i32, i32, i32) {
    %c0_i32 = arith.constant 0 : i32
    %c0_i32_0 = arith.constant 0 : i32
    %c0_i32_1 = arith.constant 0 : i32
    return %arg0, %c0_i32, %c0_i32_0 : i32, i32, i32
  }
  func.func @transform_1(%arg0: i32) -> (i32, i32) {
    %c0_i32 = arith.constant 0 : i32
    %c0_i32_0 = arith.constant 0 : i32
    %c0_i32_1 = arith.constant 0 : i32
    return %c0_i32, %c0_i32_0 : i32, i32
  }
  func.func @transform_2(%arg0: i32) -> (i32, i32) {
    %c0_i32 = arith.constant 0 : i32
    %c0_i32_0 = arith.constant 0 : i32
    %c0_i32_1 = arith.constant 0 : i32
    return %c0_i32, %c0_i32_0 : i32, i32
  }
  func.func @transform_3(%arg0: i32) -> (i32, i32) {
    %c0_i32 = arith.constant 0 : i32
    %c0_i32_0 = arith.constant 0 : i32
    %c0_i32_1 = arith.constant 0 : i32
    return %c0_i32, %c0_i32_0 : i32, i32
  }
  func.func @transform_4(%arg0: i32) -> (i32, i32, i32) {
    %c0_i32 = arith.constant 0 : i32
    %c0_i32_0 = arith.constant 0 : i32
    %c0_i32_1 = arith.constant 0 : i32
    return %arg0, %c0_i32, %c0_i32_0 : i32, i32, i32
  }
}

module attributes {stable_mosaic.version = 11 : i64} {
  func.func @_output_kernel(%arg0: i32, %arg1: memref<2x4x16xf32, #tpu.memory_space<vmem>>, %arg2: memref<4x3xf32, #tpu.memory_space<vmem>>, %arg3: memref<4x2xf32, #tpu.memory_space<vmem>>, %arg4: memref<8x4xf32, #tpu.memory_space<vmem>>, %arg5: memref<8x2xf32, #tpu.memory_space<vmem>>, %arg6: memref<2x8x16xf32, #tpu.memory_space<vmem>>, %arg7: memref<2x4x16xf32, #tpu.memory_space<vmem>>) attributes {dimension_semantics = [#tpu.dimension_semantics<parallel>], iteration_bounds = array<i64: 1>, scalar_prefetch = 0 : i64, scratch_operands = 1 : i64, tpu.core_type = #tpu.core_type<tc>, window_params = [{transform_indices = @transform_0, window_bounds = array<i64: 2, 4, 16>}, {pipeline_mode = #tpu.pipeline_mode<synchronous>, transform_indices = @transform_1, window_bounds = array<i64: 4, 3>}, {pipeline_mode = #tpu.pipeline_mode<synchronous>, transform_indices = @transform_2, window_bounds = array<i64: 4, 2>}, {pipeline_mode = #tpu.pipeline_mode<synchronous>, transform_indices = @transform_3, window_bounds = array<i64: 8, 4>}, {pipeline_mode = #tpu.pipeline_mode<synchronous>, transform_indices = @transform_4, window_bounds = array<i64: 8, 2>}, {transform_indices = @transform_5, window_bounds = array<i64: 2, 8, 16>}]} {
    %c0 = arith.constant 0 : index
    %c0_0 = arith.constant 0 : index
    %0 = vector.load %arg2[%c0, %c0_0] : memref<4x3xf32, #tpu.memory_space<vmem>>, vector<4x3xf32>
    %cst = arith.constant 0.000000e+00 : f32
    %1 = vector.broadcast %cst : f32 to vector<2x4x16xf32>
    %c0_1 = arith.constant 0 : index
    %c0_2 = arith.constant 0 : index
    %c0_3 = arith.constant 0 : index
    %2 = vector.load %arg7[%c0_1, %c0_2, %c0_3] : memref<2x4x16xf32, #tpu.memory_space<vmem>>, vector<2x4x16xf32>
    tpu.vector_store %arg7[%c0_1, %c0_2, %c0_3], %1 {strides = array<i32>} : memref<2x4x16xf32, #tpu.memory_space<vmem>>, vector<2x4x16xf32>,
    %c0_4 = arith.constant 0 : index
    %c0_5 = arith.constant 0 : index
    %c0_6 = arith.constant 0 : index
    %3 = vector.load %arg1[%c0_4, %c0_5, %c0_6] : memref<2x4x16xf32, #tpu.memory_space<vmem>>, vector<2x4x16xf32>
    %4 = vector.extract_strided_slice %3 {offsets = [0, 0, 0], sizes = [2, 4, 15], strides = [1, 1, 1]} : vector<2x4x16xf32> to vector<2x4x15xf32>
    %c0_7 = arith.constant 0 : index
    %c0_8 = arith.constant 0 : index
    %c1 = arith.constant 1 : index
    %5 = vector.load %arg7[%c0_7, %c0_8, %c1] : memref<2x4x16xf32, #tpu.memory_space<vmem>>, vector<2x4x15xf32>
    %6 = vector.extract_strided_slice %0 {offsets = [0, 0], sizes = [4, 1], strides = [1, 1]} : vector<4x3xf32> to vector<4x1xf32>
    %7 = vector.shape_cast %6 : vector<4x1xf32> to vector<1x4x1xf32>
    %8 = vector.broadcast %7 : vector<1x4x1xf32> to vector<2x4x15xf32>
    %9 = arith.mulf %8, %4 : vector<2x4x15xf32>
    %10 = arith.addf %5, %9 : vector<2x4x15xf32>
    %c0_9 = arith.constant 0 : index
    %c0_10 = arith.constant 0 : index
    %c1_11 = arith.constant 1 : index
    %11 = vector.load %arg7[%c0_9, %c0_10, %c1_11] : memref<2x4x16xf32, #tpu.memory_space<vmem>>, vector<2x4x15xf32>
    tpu.vector_store %arg7[%c0_9, %c0_10, %c1_11], %10 {strides = array<i32>} : memref<2x4x16xf32, #tpu.memory_space<vmem>>, vector<2x4x15xf32>,
    %c0_12 = arith.constant 0 : index
    %c0_13 = arith.constant 0 : index
    %c0_14 = arith.constant 0 : index
    %12 = vector.load %arg7[%c0_12, %c0_13, %c0_14] : memref<2x4x16xf32, #tpu.memory_space<vmem>>, vector<2x4x16xf32>
    %13 = vector.extract_strided_slice %0 {offsets = [0, 1], sizes = [4, 1], strides = [1, 1]} : vector<4x3xf32> to vector<4x1xf32>
    %14 = vector.shape_cast %13 : vector<4x1xf32> to vector<1x4x1xf32>
    %15 = vector.broadcast %14 : vector<1x4x1xf32> to vector<2x4x16xf32>
    %16 = arith.mulf %15, %3 : vector<2x4x16xf32>
    %17 = arith.addf %12, %16 : vector<2x4x16xf32>
    %c0_15 = arith.constant 0 : index
    %c0_16 = arith.constant 0 : index
    %c0_17 = arith.constant 0 : index
    %18 = vector.load %arg7[%c0_15, %c0_16, %c0_17] : memref<2x4x16xf32, #tpu.memory_space<vmem>>, vector<2x4x16xf32>
    tpu.vector_store %arg7[%c0_15, %c0_16, %c0_17], %17 {strides = array<i32>} : memref<2x4x16xf32, #tpu.memory_space<vmem>>, vector<2x4x16xf32>,
    %19 = vector.extract_strided_slice %3 {offsets = [0, 0, 1], sizes = [2, 4, 15], strides = [1, 1, 1]} : vector<2x4x16xf32> to vector<2x4x15xf32>
    %c0_18 = arith.constant 0 : index
    %c0_19 = arith.constant 0 : index
    %c0_20 = arith.constant 0 : index
    %20 = vector.load %arg7[%c0_18, %c0_19, %c0_20] : memref<2x4x16xf32, #tpu.memory_space<vmem>>, vector<2x4x15xf32>
    %21 = vector.extract_strided_slice %0 {offsets = [0, 2], sizes = [4, 1], strides = [1, 1]} : vector<4x3xf32> to vector<4x1xf32>
    %22 = vector.shape_cast %21 : vector<4x1xf32> to vector<1x4x1xf32>
    %23 = vector.broadcast %22 : vector<1x4x1xf32> to vector<2x4x15xf32>
    %24 = arith.mulf %23, %19 : vector<2x4x15xf32>
    %25 = arith.addf %20, %24 : vector<2x4x15xf32>
    %c0_21 = arith.constant 0 : index
    %c0_22 = arith.constant 0 : index
    %c0_23 = arith.constant 0 : index
    %26 = vector.load %arg7[%c0_21, %c0_22, %c0_23] : memref<2x4x16xf32, #tpu.memory_space<vmem>>, vector<2x4x15xf32>
    tpu.vector_store %arg7[%c0_21, %c0_22, %c0_23], %25 {strides = array<i32>} : memref<2x4x16xf32, #tpu.memory_space<vmem>>, vector<2x4x15xf32>,
    %c0_24 = arith.constant 0 : index
    %c0_25 = arith.constant 0 : index
    %27 = vector.load %arg3[%c0_24, %c0_25] : memref<4x2xf32, #tpu.memory_space<vmem>>, vector<4x2xf32>
    %c0_26 = arith.constant 0 : index
    %c0_27 = arith.constant 0 : index
    %c0_28 = arith.constant 0 : index
    %28 = vector.load %arg7[%c0_26, %c0_27, %c0_28] : memref<2x4x16xf32, #tpu.memory_space<vmem>>, vector<2x4x16xf32>
    %29 = vector.extract_strided_slice %27 {offsets = [0, 0], sizes = [4, 1], strides = [1, 1]} : vector<4x2xf32> to vector<4x1xf32>
    %30 = vector.shape_cast %29 : vector<4x1xf32> to vector<1x4x1xf32>
    %31 = vector.broadcast %30 : vector<1x4x1xf32> to vector<2x4x16xf32>
    %32 = arith.mulf %28, %31 : vector<2x4x16xf32>
    %33 = vector.extract_strided_slice %27 {offsets = [0, 1], sizes = [4, 1], strides = [1, 1]} : vector<4x2xf32> to vector<4x1xf32>
    %34 = vector.shape_cast %33 : vector<4x1xf32> to vector<1x4x1xf32>
    %35 = vector.broadcast %34 : vector<1x4x1xf32> to vector<2x4x16xf32>
    %36 = arith.addf %32, %35 : vector<2x4x16xf32>
    %cst_29 = arith.constant 0.000000e+00 : f32
    %37 = vector.broadcast %cst_29 : f32 to vector<2x4x16xf32>
    %38 = arith.maximumf %36, %37 : vector<2x4x16xf32>
    %c0_30 = arith.constant 0 : index
    %c0_31 = arith.constant 0 : index
    %39 = vector.load %arg5[%c0_30, %c0_31] : memref<8x2xf32, #tpu.memory_space<vmem>>, vector<8x2xf32>
    %c0_32 = arith.constant 0 : index
    %c0_33 = arith.constant 0 : index
    %40 = vector.load %arg4[%c0_32, %c0_33] : memref<8x4xf32, #tpu.memory_space<vmem>>, vector<8x4xf32>
    %41 = vector.extract_strided_slice %40 {offsets = [0, 0], sizes = [8, 1], strides = [1, 1]} : vector<8x4xf32> to vector<8x1xf32>
    %42 = vector.shape_cast %41 : vector<8x1xf32> to vector<1x8x1xf32>
    %43 = vector.extract_strided_slice %38 {offsets = [0, 0, 0], sizes = [2, 1, 16], strides = [1, 1, 1]} : vector<2x4x16xf32> to vector<2x1x16xf32>
    %44 = vector.broadcast %42 : vector<1x8x1xf32> to vector<2x8x16xf32>
    %45 = vector.broadcast %43 : vector<2x1x16xf32> to vector<2x8x16xf32>
    %46 = arith.mulf %44, %45 : vector<2x8x16xf32>
    %47 = vector.extract_strided_slice %40 {offsets = [0, 1], sizes = [8, 1], strides = [1, 1]} : vector<8x4xf32> to vector<8x1xf32>
    %48 = vector.shape_cast %47 : vector<8x1xf32> to vector<1x8x1xf32>
    %49 = vector.extract_strided_slice %38 {offsets = [0, 1, 0], sizes = [2, 1, 16], strides = [1, 1, 1]} : vector<2x4x16xf32> to vector<2x1x16xf32>
    %50 = vector.broadcast %48 : vector<1x8x1xf32> to vector<2x8x16xf32>
    %51 = vector.broadcast %49 : vector<2x1x16xf32> to vector<2x8x16xf32>
    %52 = arith.mulf %50, %51 : vector<2x8x16xf32>
    %53 = arith.addf %46, %52 : vector<2x8x16xf32>
    %54 = vector.extract_strided_slice %40 {offsets = [0, 2], sizes = [8, 1], strides = [1, 1]} : vector<8x4xf32> to vector<8x1xf32>
    %55 = vector.shape_cast %54 : vector<8x1xf32> to vector<1x8x1xf32>
    %56 = vector.extract_strided_slice %38 {offsets = [0, 2, 0], sizes = [2, 1, 16], strides = [1, 1, 1]} : vector<2x4x16xf32> to vector<2x1x16xf32>
    %57 = vector.broadcast %55 : vector<1x8x1xf32> to vector<2x8x16xf32>
    %58 = vector.broadcast %56 : vector<2x1x16xf32> to vector<2x8x16xf32>
    %59 = arith.mulf %57, %58 : vector<2x8x16xf32>
    %60 = arith.addf %53, %59 : vector<2x8x16xf32>
    %61 = vector.extract_strided_slice %40 {offsets = [0, 3], sizes = [8, 1], strides = [1, 1]} : vector<8x4xf32> to vector<8x1xf32>
    %62 = vector.shape_cast %61 : vector<8x1xf32> to vector<1x8x1xf32>
    %63 = vector.extract_strided_slice %38 {offsets = [0, 3, 0], sizes = [2, 1, 16], strides = [1, 1, 1]} : vector<2x4x16xf32> to vector<2x1x16xf32>
    %64 = vector.broadcast %62 : vector<1x8x1xf32> to vector<2x8x16xf32>
    %65 = vector.broadcast %63 : vector<2x1x16xf32> to vector<2x8x16xf32>
    %66 = arith.mulf %64, %65 : vector<2x8x16xf32>
    %67 = arith.addf %60, %66 : vector<2x8x16xf32>
    %68 = vector.extract_strided_slice %39 {offsets = [0, 0], sizes = [8, 1], strides = [1, 1]} : vector<8x2xf32> to vector<8x1xf32>
    %69 = vector.shape_cast %68 : vector<8x1xf32> to vector<1x8x1xf32>
    %70 = vector.broadcast %69 : vector<1x8x1xf32> to vector<2x8x16xf32>
    %71 = arith.mulf %67, %70 : vector<2x8x16xf32>
    %72 = vector.extract_strided_slice %39 {offsets = [0, 1], sizes = [8, 1], strides = [1, 1]} : vector<8x2xf32> to vector<8x1xf32>
    %73 = vector.shape_cast %72 : vector<8x1xf32> to vector<1x8x1xf32>
    %74 = vector.broadcast %73 : vector<1x8x1xf32> to vector<2x8x16xf32>
    %75 = arith.addf %71, %74 : vector<2x8x16xf32>
    %cst_34 = arith.constant 0.000000e+00 : f32
    %76 = vector.broadcast %cst_34 : f32 to vector<2x8x16xf32>
    %77 = arith.maximumf %75, %76 : vector<2x8x16xf32>
    %c0_35 = arith.constant 0 : index
    %c0_36 = arith.constant 0 : index
    %c0_37 = arith.constant 0 : index
    %78 = vector.load %arg6[%c0_35, %c0_36, %c0_37] : memref<2x8x16xf32, #tpu.memory_space<vmem>>, vector<2x8x16xf32>
    tpu.vector_store %arg6[%c0_35, %c0_36, %c0_37], %77 {strides = array<i32>} : memref<2x8x16xf32, #tpu.memory_space<vmem>>, vector<2x8x16xf32>,
    return
  }
  func.func @transform_0(%arg0: i32) -> (i32, i32, i32) {
    %c0_i32 = arith.constant 0 : i32
    %c0_i32_0 = arith.constant 0 : i32
    %c0_i32_1 = arith.constant 0 : i32
    return %arg0, %c0_i32, %c0_i32_0 : i32, i32, i32
  }
  func.func @transform_1(%arg0: i32) -> (i32, i32) {
    %c0_i32 = arith.constant 0 : i32
    %c0_i32_0 = arith.constant 0 : i32
    %c0_i32_1 = arith.constant 0 : i32
    return %c0_i32, %c0_i32_0 : i32, i32
  }
  func.func @transform_2(%arg0: i32) -> (i32, i32) {
    %c0_i32 = arith.constant 0 : i32
    %c0_i32_0 = arith.constant 0 : i32
    %c0_i32_1 = arith.constant 0 : i32
    return %c0_i32, %c0_i32_0 : i32, i32
  }
  func.func @transform_3(%arg0: i32) -> (i32, i32) {
    %c0_i32 = arith.constant 0 : i32
    %c0_i32_0 = arith.constant 0 : i32
    %c0_i32_1 = arith.constant 0 : i32
    return %c0_i32, %c0_i32_0 : i32, i32
  }
  func.func @transform_4(%arg0: i32) -> (i32, i32) {
    %c0_i32 = arith.constant 0 : i32
    %c0_i32_0 = arith.constant 0 : i32
    %c0_i32_1 = arith.constant 0 : i32
    return %c0_i32, %c0_i32_0 : i32, i32
  }
  func.func @transform_5(%arg0: i32) -> (i32, i32, i32) {
    %c0_i32 = arith.constant 0 : i32
    %c0_i32_0 = arith.constant 0 : i32
    %c0_i32_1 = arith.constant 0 : i32
    return %arg0, %c0_i32, %c0_i32_0 : i32, i32, i32
  }
}

</mosaic_0001>

<llo_original>
// kernel: dsconv.3
$region0: #{dsconv.3}
  #allocation0 [shape = 'u32[]', space=smem, size = 0x4, offset = 0x4, fixed_abs, tag = 'smem constant byte address 0x4 - core index']
  #allocation1 [shape = 'u32[144,128]{1,0:T(1,128)}', space=vmem, size = 0x12000, scoped, tag = 'internal scratch']
  #allocation2 [shape = 'f32[2,4,16]{2,1,0:T(4,128)}', space=vmem, size = 0x1000, scoped, tag = 'scratch operand']
  %s0 = inlined_call_operand.vmem [shape: f32[2,4,16], index: 0, kind: input, shape index: {}]
  %s1 = inlined_call_operand.vmem [shape: f32[4,3], index: 1, kind: input, shape index: {}]
  %s2 = inlined_call_operand.vmem [shape: f32[2,4,2], index: 2, kind: output, shape index: {}]
  %s3 = sld [smem:[#allocation0]]
  $region18: #{dsconv.3} parent=0
    _
  %s5 = ssub.s32 1, %s3
  %s6 = scalar_select 0, %s5, %s3
  // Predicated region
  $region2: #{dsconv.3} parent=0 // pred_check
    _
  $region3: #{dsconv.3} parent=0 // pred_check_branch
    %8 = sbr.rel (0) target = $region5
  $region4: #{dsconv.3} parent=0 // pred_region
    _
  $region5: #{dsconv.3} parent=0 // pred_fallthru
    _
  // Predicated region
  $region6: #{dsconv.3} parent=0 // pred_check
    _
  $region7: #{dsconv.3} parent=0 // pred_check_branch
    %10 = sbr.rel (0) target = $region9
  $region8: #{dsconv.3} parent=0 // pred_region
    _
  $region9: #{dsconv.3} parent=0 // pred_fallthru
    _
  %v11 = vld [vmem:[%s1] sm:$0xf]
  %vm12 = vcmask 125952
  %13 = vst.msk [vmem:[#allocation2] sm:$0xf] %vm12, 0.0
  %14 = vst.msk [vmem:[#allocation2 + $0x4] sm:$0xf] %vm12, 0.0
  %v15 = vld [vmem:[%s0] sm:$0xf]
  %v16 = vld [vmem:[%s0 + $0x4] sm:$0xf]
  %v17 = vld [vmem:[#allocation2] sm:$0xf]
  %v18 = vld [vmem:[#allocation2 + $0x4] sm:$0xf]
  %20 = vset.pattern.permute.xlu0 0
  %21 = vperm.xlu0 %20, %v11
  %v22 = vpop.permute.xlu0 %21
  %v24 = vmul.f32 %v22, %v15
  %v25 = vmul.f32 %v22, %v16
  %28 = vrot.lane.b32.xlu0 %v24, 1
  %v29 = vpop.permute.xlu0 %28
  %30 = vrot.lane.b32.xlu0 %v25, 1
  %v31 = vpop.permute.xlu0 %30
  %v34 = vadd.f32 %v17, %v29
  %v35 = vadd.f32 %v18, %v31
  %vm36 = vcmask 125960
  %37 = vst.msk [vmem:[#allocation2] sm:$0xf] %vm36, %v34
  %38 = vst.msk [vmem:[#allocation2 + $0x4] sm:$0xf] %vm36, %v35
  %v39 = vld [vmem:[#allocation2] sm:$0xf]
  %v40 = vld [vmem:[#allocation2 + $0x4] sm:$0xf]
  %41 = vset.pattern.permute.xlu0 1
  %42 = vperm.xlu0 %41, %v11
  %v43 = vpop.permute.xlu0 %42
  %v45 = vmul.f32 %v43, %v15
  %v46 = vmul.f32 %v43, %v16
  %v47 = vadd.f32 %v39, %v45
  %v48 = vadd.f32 %v40, %v46
  %49 = vst.msk [vmem:[#allocation2] sm:$0xf] %vm12, %v47
  %50 = vst.msk [vmem:[#allocation2 + $0x4] sm:$0xf] %vm12, %v48
  %v51 = vld [vmem:[#allocation2] sm:$0xf]
  %v52 = vld [vmem:[#allocation2 + $0x4] sm:$0xf]
  %53 = vset.pattern.permute.xlu0 2
  %54 = vperm.xlu0 %53, %v11
  %v55 = vpop.permute.xlu0 %54
  %v57 = vmul.f32 %v55, %v15
  %v58 = vmul.f32 %v55, %v16
  %61 = vrot.lane.b32.xlu0 %v57, 127
  %v62 = vpop.permute.xlu0 %61
  %63 = vrot.lane.b32.xlu0 %v58, 127
  %v64 = vpop.permute.xlu0 %63
  %v67 = vadd.f32 %v51, %v62
  %v68 = vadd.f32 %v52, %v64
  %vm69 = vcmask 117760
  %70 = vst.msk [vmem:[#allocation2] sm:$0xf] %vm69, %v67
  %71 = vst.msk [vmem:[#allocation2 + $0x4] sm:$0xf] %vm69, %v68
  %v72 = vld [vmem:[#allocation2] sm:$0xf]
  %v73 = vld [vmem:[#allocation2 + $0x4] sm:$0xf]
  %v74 = vsel %vm12, %v72, 0.0
  %75 = vadd.xlane.f32.xlu0 %v74
  %v76 = vpop.xlane.xlu0 %75
  %v77 = vsel %vm12, %v73, 0.0
  %78 = vadd.xlane.f32.xlu0 %v77
  %v79 = vpop.xlane.xlu0 %78
  %vm80 = vcmask 3072
  %81 = vst.msk [vmem:[%s2] sm:$0xf] %vm80, %v76
  %82 = vst.msk [vmem:[%s2 + $0x4] sm:$0xf] %vm80, %v79
  %v83 = vmul.f32 %v72, %v72
  %v84 = vmul.f32 %v73, %v73
  %v85 = vsel %vm12, %v83, 0.0
  %86 = vadd.xlane.f32.xlu0 %v85
  %v87 = vpop.xlane.xlu0 %86
  %v88 = vsel %vm12, %v84, 0.0
  %89 = vadd.xlane.f32.xlu0 %v88
  %v90 = vpop.xlane.xlu0 %89
  %vm91 = vcmask 11272
  %92 = vst.msk [vmem:[%s2] sm:$0xf] %vm91, %v87
  %93 = vst.msk [vmem:[%s2 + $0x4] sm:$0xf] %vm91, %v90
  // Predicated region
  $region10: #{dsconv.3} parent=0 // pred_check
    _
  $region11: #{dsconv.3} parent=0 // pred_check_branch
    %95 = sbr.rel (0) target = $region13
  $region12: #{dsconv.3} parent=0 // pred_region
    _
  $region13: #{dsconv.3} parent=0 // pred_fallthru
    _
  // Predicated region
  $region14: #{dsconv.3} parent=0 // pred_check
    _
  $region15: #{dsconv.3} parent=0 // pred_check_branch
    %97 = sbr.rel (0) target = $region17
  $region16: #{dsconv.3} parent=0 // pred_region
    _
  $region17: #{dsconv.3} parent=0 // pred_fallthru
    _

// kernel: dsconv.4
$region0: #{dsconv.4}
  #allocation0 [shape = 'u32[]', space=smem, size = 0x4, offset = 0x4, fixed_abs, tag = 'smem constant byte address 0x4 - core index']
  #allocation1 [shape = 'u32[144,128]{1,0:T(1,128)}', space=vmem, size = 0x12000, scoped, tag = 'internal scratch']
  #allocation2 [shape = 'f32[2,4,16]{2,1,0:T(4,128)}', space=vmem, size = 0x1000, scoped, tag = 'scratch operand']
  %s0 = inlined_call_operand.vmem [shape: f32[2,4,16], index: 0, kind: input, shape index: {}]
  %s1 = inlined_call_operand.vmem [shape: f32[4,3], index: 1, kind: input, shape index: {}]
  %s2 = inlined_call_operand.vmem [shape: f32[4,2], index: 2, kind: input, shape index: {}]
  %s3 = inlined_call_operand.vmem [shape: f32[8,4], index: 3, kind: input, shape index: {}]
  %s4 = inlined_call_operand.vmem [shape: f32[2,8,2], index: 4, kind: output, shape index: {}]
  %s5 = sld [smem:[#allocation0]]
  $region26: #{dsconv.4} parent=0
    _
  %s7 = ssub.s32 1, %s5
  %s8 = scalar_select 0, %s7, %s5
  // Predicated region
  $region2: #{dsconv.4} parent=0 // pred_check
    _
  $region3: #{dsconv.4} parent=0 // pred_check_branch
    %10 = sbr.rel (0) target = $region5
  $region4: #{dsconv.4} parent=0 // pred_region
    _
  $region5: #{dsconv.4} parent=0 // pred_fallthru
    _
  // Predicated region
  $region6: #{dsconv.4} parent=0 // pred_check
    _
  $region7: #{dsconv.4} parent=0 // pred_check_branch
    %12 = sbr.rel (0) target = $region9
  $region8: #{dsconv.4} parent=0 // pred_region
    _
  $region9: #{dsconv.4} parent=0 // pred_fallthru
    _
  // Predicated region
  $region10: #{dsconv.4} parent=0 // pred_check
    _
  $region11: #{dsconv.4} parent=0 // pred_check_branch
    %14 = sbr.rel (0) target = $region13
  $region12: #{dsconv.4} parent=0 // pred_region
    _
  $region13: #{dsconv.4} parent=0 // pred_fallthru
    _
  // Predicated region
  $region14: #{dsconv.4} parent=0 // pred_check
    _
  $region15: #{dsconv.4} parent=0 // pred_check_branch
    %16 = sbr.rel (0) target = $region17
  $region16: #{dsconv.4} parent=0 // pred_region
    _
  $region17: #{dsconv.4} parent=0 // pred_fallthru
    _
  %v17 = vld [vmem:[%s1] sm:$0xf]
  %vm18 = vcmask 125952
  %19 = vst.msk [vmem:[#allocation2] sm:$0xf] %vm18, 0.0
  %20 = vst.msk [vmem:[#allocation2 + $0x4] sm:$0xf] %vm18, 0.0
  %v21 = vld [vmem:[%s0] sm:$0xf]
  %v22 = vld [vmem:[%s0 + $0x4] sm:$0xf]
  %v23 = vld [vmem:[#allocation2] sm:$0xf]
  %v24 = vld [vmem:[#allocation2 + $0x4] sm:$0xf]
  %26 = vset.pattern.permute.xlu0 0
  %27 = vperm.xlu0 %26, %v17
  %v28 = vpop.permute.xlu0 %27
  %v30 = vmul.f32 %v28, %v21
  %v31 = vmul.f32 %v28, %v22
  %34 = vrot.lane.b32.xlu0 %v30, 1
  %v35 = vpop.permute.xlu0 %34
  %36 = vrot.lane.b32.xlu0 %v31, 1
  %v37 = vpop.permute.xlu0 %36
  %v40 = vadd.f32 %v23, %v35
  %v41 = vadd.f32 %v24, %v37
  %vm42 = vcmask 125960
  %43 = vst.msk [vmem:[#allocation2] sm:$0xf] %vm42, %v40
  %44 = vst.msk [vmem:[#allocation2 + $0x4] sm:$0xf] %vm42, %v41
  %v45 = vld [vmem:[#allocation2] sm:$0xf]
  %v46 = vld [vmem:[#allocation2 + $0x4] sm:$0xf]
  %47 = vset.pattern.permute.xlu0 1
  %48 = vperm.xlu0 %47, %v17
  %v49 = vpop.permute.xlu0 %48
  %v51 = vmul.f32 %v49, %v21
  %v52 = vmul.f32 %v49, %v22
  %v53 = vadd.f32 %v45, %v51
  %v54 = vadd.f32 %v46, %v52
  %55 = vst.msk [vmem:[#allocation2] sm:$0xf] %vm18, %v53
  %56 = vst.msk [vmem:[#allocation2 + $0x4] sm:$0xf] %vm18, %v54
  %v57 = vld [vmem:[#allocation2] sm:$0xf]
  %v58 = vld [vmem:[#allocation2 + $0x4] sm:$0xf]
  %59 = vset.pattern.permute.xlu0 2
  %60 = vperm.xlu0 %59, %v17
  %v61 = vpop.permute.xlu0 %60
  %v63 = vmul.f32 %v61, %v21
  %v64 = vmul.f32 %v61, %v22
  %67 = vrot.lane.b32.xlu0 %v63, 127
  %v68 = vpop.permute.xlu0 %67
  %69 = vrot.lane.b32.xlu0 %v64, 127
  %v70 = vpop.permute.xlu0 %69
  %v73 = vadd.f32 %v57, %v68
  %v74 = vadd.f32 %v58, %v70
  %vm75 = vcmask 117760
  %76 = vst.msk [vmem:[#allocation2] sm:$0xf] %vm75, %v73
  %77 = vst.msk [vmem:[#allocation2 + $0x4] sm:$0xf] %vm75, %v74
  %v78 = vld [vmem:[%s2] sm:$0xf]
  %v79 = vld [vmem:[#allocation2] sm:$0xf]
  %v80 = vld [vmem:[#allocation2 + $0x4] sm:$0xf]
  %82 = vset.pattern.permute.xlu0 0
  %83 = vperm.xlu0 %82, %v78
  %v84 = vpop.permute.xlu0 %83
  %v86 = vmul.f32 %v79, %v84
  %v87 = vmul.f32 %v80, %v84
  %88 = vset.pattern.permute.xlu0 1
  %89 = vperm.xlu0 %88, %v78
  %v90 = vpop.permute.xlu0 %89
  %v92 = vadd.f32 %v86, %v90
  %v93 = vadd.f32 %v87, %v90
  %v94 = vmax.f32 %v92, 0.0
  %v95 = vmax.f32 %v93, 0.0
  %v96 = vld [vmem:[%s3] sm:$0xff]
  %98 = vset.pattern.permute.xlu0 0
  %99 = vperm.xlu0 %98, %v96
  %v100 = vpop.permute.xlu0 %99
  %v102 = vlaneseq
  %v103 = vshrl.u32 %v102, 7
  %v104 = vsub.s32 0, %v103
  %v105 = vrot.slane %v94, %v104
  %v106 = vlaneseq
  %v107 = vshrl.u32 %v106, 7
  %v108 = vsub.s32 0, %v107
  %v109 = vrot.slane %v95, %v108
  %v110 = vmul.f32 %v100, %v105
  %v111 = vmul.f32 %v100, %v109
  %112 = vset.pattern.permute.xlu0 1
  %113 = vperm.xlu0 %112, %v96
  %v114 = vpop.permute.xlu0 %113
  %v116 = vlaneseq
  %v117 = vshrl.u32 %v116, 7
  %v118 = vsub.s32 1, %v117
  %v119 = vrot.slane %v94, %v118
  %v120 = vlaneseq
  %v121 = vshrl.u32 %v120, 7
  %v122 = vsub.s32 1, %v121
  %v123 = vrot.slane %v95, %v122
  %v124 = vmul.f32 %v114, %v119
  %v125 = vmul.f32 %v114, %v123
  %v126 = vadd.f32 %v110, %v124
  %v127 = vadd.f32 %v111, %v125
  %128 = vset.pattern.permute.xlu0 2
  %129 = vperm.xlu0 %128, %v96
  %v130 = vpop.permute.xlu0 %129
  %v132 = vlaneseq
  %v133 = vshrl.u32 %v132, 7
  %v134 = vsub.s32 2, %v133
  %v135 = vrot.slane %v94, %v134
  %v136 = vlaneseq
  %v137 = vshrl.u32 %v136, 7
  %v138 = vsub.s32 2, %v137
  %v139 = vrot.slane %v95, %v138
  %v140 = vmul.f32 %v130, %v135
  %v141 = vmul.f32 %v130, %v139
  %v142 = vadd.f32 %v126, %v140
  %v143 = vadd.f32 %v127, %v141
  %144 = vset.pattern.permute.xlu0 3
  %145 = vperm.xlu0 %144, %v96
  %v146 = vpop.permute.xlu0 %145
  %v148 = vlaneseq
  %v149 = vshrl.u32 %v148, 7
  %v150 = vsub.s32 3, %v149
  %v151 = vrot.slane %v94, %v150
  %v152 = vlaneseq
  %v153 = vshrl.u32 %v152, 7
  %v154 = vsub.s32 3, %v153
  %v155 = vrot.slane %v95, %v154
  %v156 = vmul.f32 %v146, %v151
  %v157 = vmul.f32 %v146, %v155
  %v158 = vadd.f32 %v142, %v156
  %v159 = vadd.f32 %v143, %v157
  %vm160 = vcmask 130048
  %v161 = vsel %vm160, %v158, 0.0
  %162 = vadd.xlane.f32.xlu0 %v161
  %v163 = vpop.xlane.xlu0 %162
  %v164 = vsel %vm160, %v159, 0.0
  %165 = vadd.xlane.f32.xlu0 %v164
  %v166 = vpop.xlane.xlu0 %165
  %vm167 = vcmask 7168
  %168 = vst.msk [vmem:[%s4] sm:$0xff] %vm167, %v163
  %169 = vst.msk [vmem:[%s4 + $0x8] sm:$0xff] %vm167, %v166
  %v170 = vmul.f32 %v158, %v158
  %v171 = vmul.f32 %v159, %v159
  %v172 = vsel %vm160, %v170, 0.0
  %173 = vadd.xlane.f32.xlu0 %v172
  %v174 = vpop.xlane.xlu0 %173
  %v175 = vsel %vm160, %v171, 0.0
  %176 = vadd.xlane.f32.xlu0 %v175
  %v177 = vpop.xlane.xlu0 %176
  %vm178 = vcmask 15368
  %179 = vst.msk [vmem:[%s4] sm:$0xff] %vm178, %v174
  %180 = vst.msk [vmem:[%s4 + $0x8] sm:$0xff] %vm178, %v177
  // Predicated region
  $region18: #{dsconv.4} parent=0 // pred_check
    _
  $region19: #{dsconv.4} parent=0 // pred_check_branch
    %182 = sbr.rel (0) target = $region21
  $region20: #{dsconv.4} parent=0 // pred_region
    _
  $region21: #{dsconv.4} parent=0 // pred_fallthru
    _
  // Predicated region
  $region22: #{dsconv.4} parent=0 // pred_check
    _
  $region23: #{dsconv.4} parent=0 // pred_check_branch
    %184 = sbr.rel (0) target = $region25
  $region24: #{dsconv.4} parent=0 // pred_region
    _
  $region25: #{dsconv.4} parent=0 // pred_fallthru
    _

// kernel: dsconv.5
$region0: #{dsconv.5}
  #allocation0 [shape = 'u32[]', space=smem, size = 0x4, offset = 0x4, fixed_abs, tag = 'smem constant byte address 0x4 - core index']
  #allocation1 [shape = 'u32[144,128]{1,0:T(1,128)}', space=vmem, size = 0x12000, scoped, tag = 'internal scratch']
  #allocation2 [shape = 'f32[2,4,16]{2,1,0:T(4,128)}', space=vmem, size = 0x1000, scoped, tag = 'scratch operand']
  %s0 = inlined_call_operand.vmem [shape: f32[2,4,16], index: 0, kind: input, shape index: {}]
  %s1 = inlined_call_operand.vmem [shape: f32[4,3], index: 1, kind: input, shape index: {}]
  %s2 = inlined_call_operand.vmem [shape: f32[4,2], index: 2, kind: input, shape index: {}]
  %s3 = inlined_call_operand.vmem [shape: f32[8,4], index: 3, kind: input, shape index: {}]
  %s4 = inlined_call_operand.vmem [shape: f32[8,2], index: 4, kind: input, shape index: {}]
  %s5 = inlined_call_operand.hbm [shape: f32[2,8,16], index: 5, kind: output, shape index: {}]
  %s6 = sld [smem:[#allocation0]]
  $region30: #{dsconv.5} parent=0
    _
  %s8 = ssub.s32 1, %s6
  %s9 = scalar_select 0, %s8, %s6
  $region1: #{dsconv.5} parent=0
    #allocation3 [shape = 'u8[8192]{0}', space=vmem, size = 0x2000, scoped, tag = 'output window, operand 0, single buffered']
    #allocation4 [shape = 's32[1]{0}', space=sflag, size = 0x4, scoped, tag = 'scoped memory for dsconv.5']
    %10 = vsyncpa [#allocation4], 0
    // Predicated region
    $region2: #{dsconv.5} parent=1 // pred_check
      _
    $region3: #{dsconv.5} parent=1 // pred_check_branch
      %12 = sbr.rel (0) target = $region5
    $region4: #{dsconv.5} parent=1 // pred_region
      _
    $region5: #{dsconv.5} parent=1 // pred_fallthru
      _
    // Predicated region
    $region6: #{dsconv.5} parent=1 // pred_check
      _
    $region7: #{dsconv.5} parent=1 // pred_check_branch
      %14 = sbr.rel (0) target = $region9
    $region8: #{dsconv.5} parent=1 // pred_region
      _
    $region9: #{dsconv.5} parent=1 // pred_fallthru
      _
    // Predicated region
    $region10: #{dsconv.5} parent=1 // pred_check
      _
    $region11: #{dsconv.5} parent=1 // pred_check_branch
      %16 = sbr.rel (0) target = $region13
    $region12: #{dsconv.5} parent=1 // pred_region
      _
    $region13: #{dsconv.5} parent=1 // pred_fallthru
      _
    // Predicated region
    $region14: #{dsconv.5} parent=1 // pred_check
      _
    $region15: #{dsconv.5} parent=1 // pred_check_branch
      %18 = sbr.rel (0) target = $region17
    $region16: #{dsconv.5} parent=1 // pred_region
      _
    $region17: #{dsconv.5} parent=1 // pred_fallthru
      _
    // Predicated region
    $region18: #{dsconv.5} parent=1 // pred_check
      _
    $region19: #{dsconv.5} parent=1 // pred_check_branch
      %20 = sbr.rel (0) target = $region21
    $region20: #{dsconv.5} parent=1 // pred_region
      _
    $region21: #{dsconv.5} parent=1 // pred_fallthru
      _
    %v21 = vld [vmem:[%s1] sm:$0xf]
    %vm22 = vcmask 125952
    %23 = vst.msk [vmem:[#allocation2] sm:$0xf] %vm22, 0.0
    %24 = vst.msk [vmem:[#allocation2 + $0x4] sm:$0xf] %vm22, 0.0
    %v25 = vld [vmem:[%s0] sm:$0xf]
    %v26 = vld [vmem:[%s0 + $0x4] sm:$0xf]
    %v27 = vld [vmem:[#allocation2] sm:$0xf]
    %v28 = vld [vmem:[#allocation2 + $0x4] sm:$0xf]
    %30 = vset.pattern.permute.xlu0 0
    %31 = vperm.xlu0 %30, %v21
    %v32 = vpop.permute.xlu0 %31
    %v34 = vmul.f32 %v32, %v25
    %v35 = vmul.f32 %v32, %v26
    %38 = vrot.lane.b32.xlu0 %v34, 1
    %v39 = vpop.permute.xlu0 %38
    %40 = vrot.lane.b32.xlu0 %v35, 1
    %v41 = vpop.permute.xlu0 %40
    %v44 = vadd.f32 %v27, %v39
    %v45 = vadd.f32 %v28, %v41
    %vm46 = vcmask 125960
    %47 = vst.msk [vmem:[#allocation2] sm:$0xf] %vm46, %v44
    %48 = vst.msk [vmem:[#allocation2 + $0x4] sm:$0xf] %vm46, %v45
    %v49 = vld [vmem:[#allocation2] sm:$0xf]
    %v50 = vld [vmem:[#allocation2 + $0x4] sm:$0xf]
    %51 = vset.pattern.permute.xlu0 1
    %52 = vperm.xlu0 %51, %v21
    %v53 = vpop.permute.xlu0 %52
    %v55 = vmul.f32 %v53, %v25
    %v56 = vmul.f32 %v53, %v26
    %v57 = vadd.f32 %v49, %v55
    %v58 = vadd.f32 %v50, %v56
    %59 = vst.msk [vmem:[#allocation2] sm:$0xf] %vm22, %v57
    %60 = vst.msk [vmem:[#allocation2 + $0x4] sm:$0xf] %vm22, %v58
    %v61 = vld [vmem:[#allocation2] sm:$0xf]
    %v62 = vld [vmem:[#allocation2 + $0x4] sm:$0xf]
    %63 = vset.pattern.permute.xlu0 2
    %64 = vperm.xlu0 %63, %v21
    %v65 = vpop.permute.xlu0 %64
    %v67 = vmul.f32 %v65, %v25
    %v68 = vmul.f32 %v65, %v26
    %71 = vrot.lane.b32.xlu0 %v67, 127
    %v72 = vpop.permute.xlu0 %71
    %73 = vrot.lane.b32.xlu0 %v68, 127
    %v74 = vpop.permute.xlu0 %73
    %v77 = vadd.f32 %v61, %v72
    %v78 = vadd.f32 %v62, %v74
    %vm79 = vcmask 117760
    %80 = vst.msk [vmem:[#allocation2] sm:$0xf] %vm79, %v77
    %81 = vst.msk [vmem:[#allocation2 + $0x4] sm:$0xf] %vm79, %v78
    %v82 = vld [vmem:[%s2] sm:$0xf]
    %v83 = vld [vmem:[#allocation2] sm:$0xf]
    %v84 = vld [vmem:[#allocation2 + $0x4] sm:$0xf]
    %86 = vset.pattern.permute.xlu0 0
    %87 = vperm.xlu0 %86, %v82
    %v88 = vpop.permute.xlu0 %87
    %v90 = vmul.f32 %v83, %v88
    %v91 = vmul.f32 %v84, %v88
    %92 = vset.pattern.permute.xlu0 1
    %93 = vperm.xlu0 %92, %v82
    %v94 = vpop.permute.xlu0 %93
    %v96 = vadd.f32 %v90, %v94
    %v97 = vadd.f32 %v91, %v94
    %v98 = vmax.f32 %v96, 0.0
    %v99 = vmax.f32 %v97, 0.0
    %v100 = vld [vmem:[%s4] sm:$0xff]
    %v101 = vld [vmem:[%s3] sm:$0xff]
    %103 = vset.pattern.permute.xlu0 0
    %104 = vperm.xlu0 %103, %v101
    %v105 = vpop.permute.xlu0 %104
    %v107 = vlaneseq
    %v108 = vshrl.u32 %v107, 7
    %v109 = vsub.s32 0, %v108
    %v110 = vrot.slane %v98, %v109
    %v111 = vlaneseq
    %v112 = vshrl.u32 %v111, 7
    %v113 = vsub.s32 0, %v112
    %v114 = vrot.slane %v99, %v113
    %v115 = vmul.f32 %v105, %v110
    %v116 = vmul.f32 %v105, %v114
    %117 = vset.pattern.permute.xlu0 1
    %118 = vperm.xlu0 %117, %v101
    %v119 = vpop.permute.xlu0 %118
    %v121 = vlaneseq
    %v122 = vshrl.u32 %v121, 7
    %v123 = vsub.s32 1, %v122
    %v124 = vrot.slane %v98, %v123
    %v125 = vlaneseq
    %v126 = vshrl.u32 %v125, 7
    %v127 = vsub.s32 1, %v126
    %v128 = vrot.slane %v99, %v127
    %v129 = vmul.f32 %v119, %v124
    %v130 = vmul.f32 %v119, %v128
    %v131 = vadd.f32 %v115, %v129
    %v132 = vadd.f32 %v116, %v130
    %133 = vset.pattern.permute.xlu0 2
    %134 = vperm.xlu0 %133, %v101
    %v135 = vpop.permute.xlu0 %134
    %v137 = vlaneseq
    %v138 = vshrl.u32 %v137, 7
    %v139 = vsub.s32 2, %v138
    %v140 = vrot.slane %v98, %v139
    %v141 = vlaneseq
    %v142 = vshrl.u32 %v141, 7
    %v143 = vsub.s32 2, %v142
    %v144 = vrot.slane %v99, %v143
    %v145 = vmul.f32 %v135, %v140
    %v146 = vmul.f32 %v135, %v144
    %v147 = vadd.f32 %v131, %v145
    %v148 = vadd.f32 %v132, %v146
    %149 = vset.pattern.permute.xlu0 3
    %150 = vperm.xlu0 %149, %v101
    %v151 = vpop.permute.xlu0 %150
    %v153 = vlaneseq
    %v154 = vshrl.u32 %v153, 7
    %v155 = vsub.s32 3, %v154
    %v156 = vrot.slane %v98, %v155
    %v157 = vlaneseq
    %v158 = vshrl.u32 %v157, 7
    %v159 = vsub.s32 3, %v158
    %v160 = vrot.slane %v99, %v159
    %v161 = vmul.f32 %v151, %v156
    %v162 = vmul.f32 %v151, %v160
    %v163 = vadd.f32 %v147, %v161
    %v164 = vadd.f32 %v148, %v162
    %166 = vset.pattern.permute.xlu0 0
    %167 = vperm.xlu0 %166, %v100
    %v168 = vpop.permute.xlu0 %167
    %v170 = vmul.f32 %v163, %v168
    %v171 = vmul.f32 %v164, %v168
    %172 = vset.pattern.permute.xlu0 1
    %173 = vperm.xlu0 %172, %v100
    %v174 = vpop.permute.xlu0 %173
    %v176 = vadd.f32 %v170, %v174
    %v177 = vadd.f32 %v171, %v174
    %v178 = vmax.f32 %v176, 0.0
    %v179 = vmax.f32 %v177, 0.0
    %vm180 = vcmask 130048
    %181 = vst.msk [vmem:[#allocation3] sm:$0xff] %vm180, %v178
    %182 = vst.msk [vmem:[#allocation3 + $0x8] sm:$0xff] %vm180, %v179
    // Predicated region
    $region22: #{dsconv.5} parent=1 // pred_check
      _
    $region23: #{dsconv.5} parent=1 // pred_check_branch
      %184 = sbr.rel (0) target = $region25
    $region24: #{dsconv.5} parent=1 // pred_region
      %s186 = ssub.s32 256, 256
      %187 = vsyncadd [#allocation4], %s186
      %s188 = sshll.u32 [#allocation3], 4
      %s189 = int_to_ptr.vmem [resolvable:$true] %s188
      %194 = dma.vmem_to_hbm [thread:$0]  %s189, 256, %s5, [#allocation4], 128, 128, 8
    $region25: #{dsconv.5} parent=1 // pred_fallthru
      _
    // Predicated region
    $region26: #{dsconv.5} parent=1 // pred_check
      _
    $region27: #{dsconv.5} parent=1 // pred_check_branch
      %196 = sbr.rel (0) target = $region29
    $region28: #{dsconv.5} parent=1 // pred_region
      %197 = dma.done [#allocation4], 256
    $region29: #{dsconv.5} parent=1 // pred_fallthru
      _
    %198 = vsyncpa [#allocation4], 1

</llo_original>
